<compile_context>
chip_gen: v6e
topology: v6e:2x2x1
jax: 0.10.0
libtpu: 0.0.40
codegen_flags: <defaults>
</compile_context>

<pallas_src>
import functools

import numpy as np
import jax
import jax.numpy as jnp
from jax.experimental import pallas as pl
from jax.experimental.pallas import tpu as pltpu

N_SIGMA = 1  # module default: sigma is channel 2, seed map is channel 3


# ---------------------------------------------------------------------------
# Pallas kernel: one (batch, instance-slot) pair per grid step
# ---------------------------------------------------------------------------
def _inst_kernel(ids_ref,                     # SMEM scalar prefetch: (B, K) int32
                 pred_ref, inst_ref, lbl_ref,  # inputs
                 dist_ref, stats_ref,          # outputs
                 se_x, se_y, seed, xy_x, xy_y, bgrow,  # VMEM scratch
                 *, to_center: bool, width: int):
    b = pl.program_id(0)
    k = pl.program_id(1)
    R, L = se_x.shape
    lane = jax.lax.broadcasted_iota(jnp.int32, (1, L), 1)

    # ---- per-batch (k-invariant) work, hoisted to the first instance slot ----
    @pl.when(k == 0)
    def _per_batch_init():
        rr = jax.lax.broadcasted_iota(jnp.int32, (R, L), 0).astype(jnp.float32)
        cc = jax.lax.broadcasted_iota(jnp.int32, (R, L), 1).astype(jnp.float32)
        flat = rr * float(L) + cc                      # flattened pixel index
        # exact row/col recovery via f32 (margin 0.5/W >> rounding error for
        # H <= 1024, W <= 2048 -- same bound as the module's xym buffer).
        row = jnp.floor((flat + 0.5) * (1.0 / width))
        col = flat - row * float(width)
        xy_x[...] = col * (2.0 / 2047.0)               # linspace(0, 2, 2048)[:W]
        xy_y[...] = row * (1.0 / 1023.0)               # linspace(0, 1, 1024)[:H]
        se_x[...] = jnp.tanh(pred_ref[0, 0]) + xy_x[...]
        se_y[...] = jnp.tanh(pred_ref[0, 1]) + xy_y[...]
        sm = jax.nn.sigmoid(pred_ref[0, 2 + N_SIGMA])
        seed[...] = sm
        bg = (lbl_ref[0] == 0).astype(jnp.float32)     # padded pixels have lbl=1
        bgrow[...] = jnp.where(lane == 3, jnp.sum(bg * sm * sm), 0.0)

    # ---- per-slot work ----
    inst_id = ids_ref[b, k]                            # -1 on padded slots
    mask = (inst_ref[0] == inst_id).astype(jnp.float32)
    cnt = jnp.sum(mask)
    inv = 1.0 / jnp.maximum(cnt, 1.0)                  # safe on empty slots

    sx = se_x[...]
    sy = se_y[...]
    if to_center:
        cx = jnp.sum(xy_x[...] * mask) * inv
        cy = jnp.sum(xy_y[...] * mask) * inv
    else:
        cx = jnp.sum(sx * mask) * inv
        cy = jnp.sum(sy * mask) * inv

    sigma = pred_ref[0, 2]                             # n_sigma == 1
    s_mean = jnp.sum(sigma * mask) * inv
    var_term = jnp.sum(mask * (sigma - s_mean) ** 2) * inv

    s_exp = jnp.exp(s_mean * 10.0)
    dist = jnp.exp(-((sx - cx) ** 2 + (sy - cy) ** 2) * s_exp)
    seed_term = jnp.sum(mask * (seed[...] - dist) ** 2)

    # TODO(synk): dist could be emitted as bfloat16 to halve the dominant HBM
    # write; kept f32 to preserve the module's numerics bit-for-bit-ish.
    dist_ref[0, 0] = dist

    # lane-dense stats row: [0]=var  [1]=seed  [2]=pixel count  [3]=bg seed loss
    stats_ref[0, 0] = (jnp.where(lane == 0, var_term, 0.0)
                       + jnp.where(lane == 1, seed_term, 0.0)
                       + jnp.where(lane == 2, cnt, 0.0)
                       + bgrow[...])


def _run_instance_kernel(pred_lane, inst_lane, lbl_lane, ids, *, width, to_center):
    B, C, R, L = pred_lane.shape
    K = ids.shape[1]
    kernel = functools.partial(_inst_kernel, to_center=to_center, width=width)

    # Resident footprint: 5 scratch planes + 1 row + double-buffered IO planes.
    plane = R * L * 4
    vmem_est = plane * (6 + 2 * (C + 1 + 1 + 1)) + 64 * 1024
    vmem_limit = int(min(max(2 * vmem_est, 16 * 1024 * 1024), 64 * 1024 * 1024))
    # TODO(synk): for images whose footprint exceeds ~64 MiB (v7x VMEM), add a
    # spatial strip grid axis with a two-pass masked reduction instead of
    # whole-image residency.

    dist, stats = pl.pallas_call(
        kernel,
        out_shape=(
            jax.ShapeDtypeStruct((B, K, R, L), jnp.float32),
            jax.ShapeDtypeStruct((B, K, 1, L), jnp.float32),
        ),
        grid_spec=pltpu.PrefetchScalarGridSpec(
            num_scalar_prefetch=1,
            grid=(B, K),
            in_specs=[
                pl.BlockSpec((1, C, R, L), lambda b, k, ids: (b, 0, 0, 0)),
                pl.BlockSpec((1, R, L), lambda b, k, ids: (b, 0, 0)),
                pl.BlockSpec((1, R, L), lambda b, k, ids: (b, 0, 0)),
            ],
            out_specs=[
                pl.BlockSpec((1, 1, R, L), lambda b, k, ids: (b, k, 0, 0)),
                pl.BlockSpec((1, 1, 1, L), lambda b, k, ids: (b, k, 0, 0)),
            ],
            scratch_shapes=[
                pltpu.VMEM((R, L), jnp.float32),   # se_x
                pltpu.VMEM((R, L), jnp.float32),   # se_y
                pltpu.VMEM((R, L), jnp.float32),   # seed map
                pltpu.VMEM((R, L), jnp.float32),   # xy_x
                pltpu.VMEM((R, L), jnp.float32),   # xy_y
                pltpu.VMEM((1, L), jnp.float32),   # bg seed loss (lane 3)
            ],
        ),
        compiler_params=pltpu.CompilerParams(
            dimension_semantics=("parallel", "arbitrary"),
            vmem_limit_bytes=vmem_limit),
    )(ids, pred_lane, inst_lane, lbl_lane)
    return dist, stats


# ---------------------------------------------------------------------------
# Pure-JAX mirror of the kernel math (sanity reference only)
# ---------------------------------------------------------------------------
def _make_xym(H, W):
    xs = jnp.arange(W, dtype=jnp.float32) * jnp.float32(2.0 / 2047.0)
    ys = jnp.arange(H, dtype=jnp.float32) * jnp.float32(1.0 / 1023.0)
    return jnp.stack([jnp.broadcast_to(xs[None, :], (H, W)),
                      jnp.broadcast_to(ys[:, None], (H, W))], 0)


def _pixel_stats_ref(pred, xym, masks, bg_masks, *, to_center=True):
    cnt = masks.sum((-2, -1))
    inv = 1.0 / jnp.maximum(cnt, 1.0)
    se_x = jnp.tanh(pred[:, 0])[:, None, :, :] + xym[0]
    se_y = jnp.tanh(pred[:, 1])[:, None, :, :] + xym[1]
    if to_center:
        cx = (xym[0] * masks).sum((-2, -1)) * inv
        cy = (xym[1] * masks).sum((-2, -1)) * inv
    else:
        cx = (se_x * masks).sum((-2, -1)) * inv
        cy = (se_y * masks).sum((-2, -1)) * inv
    sigma = pred[:, 2][:, None, :, :]
    s_mean = (sigma * masks).sum((-2, -1)) * inv
    var_t = (masks * (sigma - s_mean[..., None, None]) ** 2).sum((-2, -1)) * inv
    s_exp = jnp.exp(s_mean * 10.0)[..., None, None]
    dist = jnp.exp(-(((se_x - cx[..., None, None]) ** 2
                      + (se_y - cy[..., None, None]) ** 2) * s_exp))
    seed_map = jax.nn.sigmoid(pred[:, 2 + N_SIGMA])
    seed_t = (masks * (seed_map[:, None] - dist) ** 2).sum((-2, -1))
    bg_t = (bg_masks * seed_map ** 2).sum((-2, -1))
    return dist, var_t, seed_t, cnt, bg_t


# ---------------------------------------------------------------------------
# Lovász hinge (sort-based, kept in plain JAX)
# ---------------------------------------------------------------------------
def _lovasz_grad(gt_sorted):
    gts = jnp.sum(gt_sorted)
    intersection = gts - jnp.cumsum(gt_sorted)
    union = gts + jnp.cumsum(1.0 - gt_sorted)
    jaccard = 1.0 - intersection / union
    return jnp.concatenate([jaccard[:1], jaccard[1:] - jaccard[:-1]])


def _lovasz_hinge_flat(logits, labels):
    # TODO(synk): the descending sort of per-pixel errors has no clean Pallas
    # equivalent; this stays in plain JAX (jnp.argsort).
    signs = 2.0 * labels - 1.0
    errors = 1.0 - logits * signs
    perm = jnp.argsort(-errors)
    errors_sorted = errors[perm]
    gt_sorted = labels[perm]
    grad = _lovasz_grad(gt_sorted)
    return jnp.dot(jax.nn.relu(errors_sorted), grad)


# ---------------------------------------------------------------------------
# SpatialEmbLoss.forward
# ---------------------------------------------------------------------------
def spatial_emb_loss(prediction, instances, labels, *, to_center=True,
                     foreground_weight=1.0, w_inst=1.0, w_var=10.0, w_seed=1.0,
                     use_pallas=True):
    prediction = jnp.asarray(prediction, jnp.float32)
    B, C, H, W = prediction.shape
    assert C == 2 + N_SIGMA + 1
    assert H <= 1024 and W <= 2048  # same bound as the module's xym buffer

    inst_np = np.asarray(instances).reshape(B, H, W).astype(np.int32)
    lbl_np = np.asarray(labels).reshape(B, H, W).astype(np.int32)

    # TODO(synk): torch.unique() is data dependent; ids are extracted on the
    # host, but only a tiny (B, K) id table is uploaded (no per-pixel masks).
    ids_per_b = []
    for b in range(B):
        u = np.unique(inst_np[b])
        ids_per_b.append(u[u != 0])
    K = max(1, max(len(i) for i in ids_per_b))
    ids_np = np.full((B, K), -1, np.int32)     # -1 = padded slot (never matches)
    for b, idlist in enumerate(ids_per_b):
        ids_np[b, :len(idlist)] = idlist
    obj_count = jnp.asarray([len(i) for i in ids_per_b], jnp.float32)

    # Lane-dense flattening: (H, W) -> (R, 128) with R = ceil(H*W/128).
    N = H * W
    P = ((N + 127) // 128) * 128
    R = P // 128
    pad = P - N

    ids = jnp.asarray(ids_np)
    inst_dev = jnp.asarray(inst_np)
    lbl_dev = jnp.asarray(lbl_np)

    pred_flat = prediction.reshape(B, C, N)
    inst_flat = inst_dev.reshape(B, N)
    lbl_flat = lbl_dev.reshape(B, N)
    if pad:
        pred_flat = jnp.pad(pred_flat, ((0, 0), (0, 0), (0, pad)))
        # -2 never matches a real (nonzero, nonnegative) id nor the -1 slot pad.
        inst_flat = jnp.pad(inst_flat, ((0, 0), (0, pad)), constant_values=-2)
        lbl_flat = jnp.pad(lbl_flat, ((0, 0), (0, pad)), constant_values=1)
    pred_lane = pred_flat.reshape(B, C, R, 128)
    inst_lane = inst_flat.reshape(B, R, 128)
    lbl_lane = lbl_flat.reshape(B, R, 128)

    if use_pallas:
        dist_lane, stats = _run_instance_kernel(
            pred_lane, inst_lane, lbl_lane, ids, width=W, to_center=to_center)
        var_t = stats[:, :, 0, 0]
        seed_t = stats[:, :, 0, 1]
        cnt_t = stats[:, :, 0, 2]
        bg_t = stats[:, 0, 0, 3]
        dist_flat = dist_lane.reshape(B, K, P)[:, :, :N]
    else:
        masks = (inst_dev[:, None, :, :] == ids[:, :, None, None]).astype(jnp.float32)
        bg = (lbl_dev == 0).astype(jnp.float32)
        xym = _make_xym(H, W)
        dist4, var_t, seed_t, cnt_t, bg_t = _pixel_stats_ref(
            prediction, xym, masks, bg, to_center=to_center)
        dist_flat = dist4.reshape(B, K, N)

    valid = (cnt_t > 0).astype(jnp.float32)
    mflat = (inst_dev.reshape(B, 1, N) == ids[:, :, None]).astype(jnp.float32)
    logits = dist_flat * 2.0 - 1.0
    lov = jax.vmap(jax.vmap(_lovasz_hinge_flat))(logits, mflat)   # (B, K)

    obj_safe = jnp.maximum(obj_count, 1.0)
    inst_b = jnp.sum(lov * valid, axis=1) / obj_safe
    var_b = jnp.sum(var_t * valid, axis=1) / obj_safe
    seed_b = (bg_t + foreground_weight * jnp.sum(seed_t * valid, axis=1)) / float(H * W)
    loss_b = w_inst * inst_b + w_var * var_b + w_seed * seed_b
    return jnp.sum(loss_b) / B + jnp.sum(prediction) * 0.0


if __name__ == "__main__":
    key = jax.random.PRNGKey(0)
    kp, ki = jax.random.split(key)
    B, H, W = 2, 16, 16
    C = 2 + N_SIGMA + 1
    prediction = jax.random.normal(kp, (B, C, H, W), jnp.float32)
    instances = jax.random.randint(ki, (B, 1, H, W), 0, 4, dtype=jnp.int32)
    labels = (instances[:, 0] > 0).astype(jnp.int32)

    loss = spatial_emb_loss(prediction, instances, labels)
    loss = jax.block_until_ready(loss)

    loss_ref = spatial_emb_loss(prediction, instances, labels, use_pallas=False)
    loss_ref = jax.block_until_ready(loss_ref)

    assert bool(jnp.isfinite(loss)), "loss is not finite"
    assert abs(float(loss) - float(loss_ref)) <= 2e-3 * max(1.0, abs(float(loss_ref))), (
        float(loss), float(loss_ref))
    print("KERNEL_OK")
</pallas_src>

<mosaic_0001>
module attributes {stable_mosaic.version = 11 : i64} {
  func.func @_inst_kernel(%arg0: i32, %arg1: i32, %arg2: memref<2x3xi32, #tpu.memory_space<smem>>, %arg3: memref<1x4x2x128xf32, #tpu.memory_space<vmem>>, %arg4: memref<1x2x128xi32, #tpu.memory_space<vmem>>, %arg5: memref<1x2x128xi32, #tpu.memory_space<vmem>>, %arg6: memref<1x1x2x128xf32, #tpu.memory_space<vmem>>, %arg7: memref<1x1x1x128xf32, #tpu.memory_space<vmem>>, %arg8: memref<2x128xf32, #tpu.memory_space<vmem>>, %arg9: memref<2x128xf32, #tpu.memory_space<vmem>>, %arg10: memref<2x128xf32, #tpu.memory_space<vmem>>, %arg11: memref<2x128xf32, #tpu.memory_space<vmem>>, %arg12: memref<2x128xf32, #tpu.memory_space<vmem>>, %arg13: memref<1x128xf32, #tpu.memory_space<vmem>>) attributes {dimension_semantics = [#tpu.dimension_semantics<parallel>, #tpu.dimension_semantics<arbitrary>], iteration_bounds = array<i64: 2, 3>, scalar_prefetch = 1 : i64, scratch_operands = 6 : i64, tpu.core_type = #tpu.core_type<tc>, window_params = [{transform_indices = @transform_0, window_bounds = array<i64: 1, 4, 2, 128>}, {transform_indices = @transform_1, window_bounds = array<i64: 1, 2, 128>}, {transform_indices = @transform_2, window_bounds = array<i64: 1, 2, 128>}, {transform_indices = @transform_3, window_bounds = array<i64: 1, 1, 2, 128>}, {transform_indices = @transform_4, window_bounds = array<i64: 1, 1, 1, 128>}]} {
    %0 = tpu.iota {dimensions = array<i32: 1>} : vector<1x128xi32>
    %c0_i32 = arith.constant 0 : i32
    %1 = arith.cmpi eq, %arg1, %c0_i32 : i32
    %2 = arith.extui %1 : i1 to i32
    %c0_i32_0 = arith.constant 0 : i32
    %3 = arith.cmpi ne, %2, %c0_i32_0 : i32
    scf.if %3 {
      %99 = tpu.iota {dimensions = array<i32: 0>} : vector<2x128xi32>
      %100 = arith.sitofp %99 : vector<2x128xi32> to vector<2x128xf32>
      %101 = tpu.iota {dimensions = array<i32: 1>} : vector<2x128xi32>
      %102 = arith.sitofp %101 : vector<2x128xi32> to vector<2x128xf32>
      %cst_39 = arith.constant 1.280000e+02 : f32
      %103 = vector.broadcast %cst_39 : f32 to vector<2x128xf32>
      %104 = arith.mulf %100, %103 : vector<2x128xf32>
      %105 = arith.addf %104, %102 : vector<2x128xf32>
      %cst_40 = arith.constant 5.000000e-01 : f32
      %106 = vector.broadcast %cst_40 : f32 to vector<2x128xf32>
      %107 = arith.addf %105, %106 : vector<2x128xf32>
      %cst_41 = arith.constant 6.250000e-02 : f32
      %108 = vector.broadcast %cst_41 : f32 to vector<2x128xf32>
      %109 = arith.mulf %107, %108 : vector<2x128xf32>
      %110 = math.floor %109 : vector<2x128xf32>
      %cst_42 = arith.constant 1.600000e+01 : f32
      %111 = vector.broadcast %cst_42 : f32 to vector<2x128xf32>
      %112 = arith.mulf %110, %111 : vector<2x128xf32>
      %113 = arith.subf %105, %112 : vector<2x128xf32>
      %cst_43 = arith.constant 9.77039569E-4 : f32
      %114 = vector.broadcast %cst_43 : f32 to vector<2x128xf32>
      %115 = arith.mulf %113, %114 : vector<2x128xf32>
      %c0_44 = arith.constant 0 : index
      %c0_45 = arith.constant 0 : index
      %116 = vector.load %arg11[%c0_44, %c0_45] : memref<2x128xf32, #tpu.memory_space<vmem>>, vector<2x128xf32>
      tpu.vector_store %arg11[%c0_44, %c0_45], %115 {strides = array<i32>} : memref<2x128xf32, #tpu.memory_space<vmem>>, vector<2x128xf32>,
      %cst_46 = arith.constant 9.77517105E-4 : f32
      %117 = vector.broadcast %cst_46 : f32 to vector<2x128xf32>
      %118 = arith.mulf %110, %117 : vector<2x128xf32>
      %c0_47 = arith.constant 0 : index
      %c0_48 = arith.constant 0 : index
      %119 = vector.load %arg12[%c0_47, %c0_48] : memref<2x128xf32, #tpu.memory_space<vmem>>, vector<2x128xf32>
      tpu.vector_store %arg12[%c0_47, %c0_48], %118 {strides = array<i32>} : memref<2x128xf32, #tpu.memory_space<vmem>>, vector<2x128xf32>,
      %c0_49 = arith.constant 0 : index
      %c0_50 = arith.constant 0 : index
      %c0_51 = arith.constant 0 : index
      %c0_52 = arith.constant 0 : index
      %120 = vector.load %arg3[%c0_49, %c0_50, %c0_51, %c0_52] : memref<1x4x2x128xf32, #tpu.memory_space<vmem>>, vector<1x1x2x128xf32>
      %121 = vector.shape_cast %120 : vector<1x1x2x128xf32> to vector<2x128xf32>
      %122 = math.tanh %121 : vector<2x128xf32>
      %c0_53 = arith.constant 0 : index
      %c0_54 = arith.constant 0 : index
      %123 = vector.load %arg11[%c0_53, %c0_54] : memref<2x128xf32, #tpu.memory_space<vmem>>, vector<2x128xf32>
      %124 = arith.addf %122, %123 : vector<2x128xf32>
      %c0_55 = arith.constant 0 : index
      %c0_56 = arith.constant 0 : index
      %125 = vector.load %arg8[%c0_55, %c0_56] : memref<2x128xf32, #tpu.memory_space<vmem>>, vector<2x128xf32>
      tpu.vector_store %arg8[%c0_55, %c0_56], %124 {strides = array<i32>} : memref<2x128xf32, #tpu.memory_space<vmem>>, vector<2x128xf32>,
      %c0_57 = arith.constant 0 : index
      %c1 = arith.constant 1 : index
      %c0_58 = arith.constant 0 : index
      %c0_59 = arith.constant 0 : index
      %126 = vector.load %arg3[%c0_57, %c1, %c0_58, %c0_59] : memref<1x4x2x128xf32, #tpu.memory_space<vmem>>, vector<1x1x2x128xf32>
      %127 = vector.shape_cast %126 : vector<1x1x2x128xf32> to vector<2x128xf32>
      %128 = math.tanh %127 : vector<2x128xf32>
      %c0_60 = arith.constant 0 : index
      %c0_61 = arith.constant 0 : index
      %129 = vector.load %arg12[%c0_60, %c0_61] : memref<2x128xf32, #tpu.memory_space<vmem>>, vector<2x128xf32>
      %130 = arith.addf %128, %129 : vector<2x128xf32>
      %c0_62 = arith.constant 0 : index
      %c0_63 = arith.constant 0 : index
      %131 = vector.load %arg9[%c0_62, %c0_63] : memref<2x128xf32, #tpu.memory_space<vmem>>, vector<2x128xf32>
      tpu.vector_store %arg9[%c0_62, %c0_63], %130 {strides = array<i32>} : memref<2x128xf32, #tpu.memory_space<vmem>>, vector<2x128xf32>,
      %c0_64 = arith.constant 0 : index
      %c3 = arith.constant 3 : index
      %c0_65 = arith.constant 0 : index
      %c0_66 = arith.constant 0 : index
      %132 = vector.load %arg3[%c0_64, %c3, %c0_65, %c0_66] : memref<1x4x2x128xf32, #tpu.memory_space<vmem>>, vector<1x1x2x128xf32>
      %133 = vector.shape_cast %132 : vector<1x1x2x128xf32> to vector<2x128xf32>
      %134 = arith.negf %133 : vector<2x128xf32>
      %135 = math.exp %134 : vector<2x128xf32>
      %cst_67 = arith.constant 1.000000e+00 : f32
      %136 = vector.broadcast %cst_67 : f32 to vector<2x128xf32>
      %137 = arith.addf %136, %135 : vector<2x128xf32>
      %138 = arith.divf %136, %137 : vector<2x128xf32>
      %c0_68 = arith.constant 0 : index
      %c0_69 = arith.constant 0 : index
      %139 = vector.load %arg10[%c0_68, %c0_69] : memref<2x128xf32, #tpu.memory_space<vmem>>, vector<2x128xf32>
      tpu.vector_store %arg10[%c0_68, %c0_69], %138 {strides = array<i32>} : memref<2x128xf32, #tpu.memory_space<vmem>>, vector<2x128xf32>,
      %c0_70 = arith.constant 0 : index
      %c0_71 = arith.constant 0 : index
      %c0_72 = arith.constant 0 : index
      %140 = vector.load %arg5[%c0_70, %c0_71, %c0_72] : memref<1x2x128xi32, #tpu.memory_space<vmem>>, vector<1x2x128xi32>
      %141 = vector.shape_cast %140 : vector<1x2x128xi32> to vector<2x128xi32>
      %c0_i32_73 = arith.constant 0 : i32
      %142 = vector.broadcast %c0_i32_73 : i32 to vector<2x128xi32>
      %143 = arith.cmpi eq, %141, %142 : vector<2x128xi32>
      %144 = arith.extui %143 : vector<2x128xi1> to vector<2x128xi32>
      %145 = arith.sitofp %144 : vector<2x128xi32> to vector<2x128xf32>
      %c3_i32 = arith.constant 3 : i32
      %146 = vector.broadcast %c3_i32 : i32 to vector<1x128xi32>
      %147 = arith.cmpi eq, %0, %146 : vector<1x128xi32>
      %148 = arith.mulf %145, %138 : vector<2x128xf32>
      %149 = arith.mulf %148, %138 : vector<2x128xf32>
      %150 = vector.shape_cast %149 : vector<2x128xf32> to vector<1x2x128xf32>
      %cst_74 = arith.constant dense<0.000000e+00> : vector<1xf32>
      %151 = vector.multi_reduction <add>, %150, %cst_74 [1, 2] : vector<1x2x128xf32> to vector<1xf32>
      %152 = vector.shape_cast %151 : vector<1xf32> to vector<1x1x1xf32>
      %153 = vector.extract %152[0, 0, 0] : f32 from vector<1x1x1xf32>
      %cst_75 = arith.constant 0.000000e+00 : f32
      %154 = vector.broadcast %153 : f32 to vector<1x128xf32>
      %155 = vector.broadcast %cst_75 : f32 to vector<1x128xf32>
      %156 = arith.select %147, %154, %155 : vector<1x128xi1>, vector<1x128xf32>
      %c0_76 = arith.constant 0 : index
      %c0_77 = arith.constant 0 : index
      %157 = vector.load %arg13[%c0_76, %c0_77] : memref<1x128xf32, #tpu.memory_space<vmem>>, vector<1x128xf32>
      tpu.vector_store %arg13[%c0_76, %c0_77], %156 {strides = array<i32>} : memref<1x128xf32, #tpu.memory_space<vmem>>, vector<1x128xf32>,
    } else {
    }
    %4 = arith.index_cast %arg0 : i32 to index
    %5 = arith.index_cast %arg1 : i32 to index
    %6 = memref.load %arg2[%4, %5] : memref<2x3xi32, #tpu.memory_space<smem>>
    %c0 = arith.constant 0 : index
    %c0_1 = arith.constant 0 : index
    %c0_2 = arith.constant 0 : index
    %7 = vector.load %arg4[%c0, %c0_1, %c0_2] : memref<1x2x128xi32, #tpu.memory_space<vmem>>, vector<1x2x128xi32>
    %8 = vector.shape_cast %7 : vector<1x2x128xi32> to vector<2x128xi32>
    %9 = vector.broadcast %6 : i32 to vector<2x128xi32>
    %10 = arith.cmpi eq, %8, %9 : vector<2x128xi32>
    %11 = arith.extui %10 : vector<2x128xi1> to vector<2x128xi32>
    %12 = arith.sitofp %11 : vector<2x128xi32> to vector<2x128xf32>
    %13 = vector.shape_cast %12 : vector<2x128xf32> to vector<1x2x128xf32>
    %cst = arith.constant dense<0.000000e+00> : vector<1xf32>
    %14 = vector.multi_reduction <add>, %13, %cst [1, 2] : vector<1x2x128xf32> to vector<1xf32>
    %15 = vector.shape_cast %14 : vector<1xf32> to vector<1x1x1xf32>
    %16 = vector.extract %15[0, 0, 0] : f32 from vector<1x1x1xf32>
    %cst_3 = arith.constant 1.000000e+00 : f32
    %17 = arith.maximumf %16, %cst_3 : f32
    %cst_4 = arith.constant 1.000000e+00 : f32
    %18 = arith.divf %cst_4, %17 : f32
    %c0_5 = arith.constant 0 : index
    %c0_6 = arith.constant 0 : index
    %19 = vector.load %arg8[%c0_5, %c0_6] : memref<2x128xf32, #tpu.memory_space<vmem>>, vector<2x128xf32>
    %c0_7 = arith.constant 0 : index
    %c0_8 = arith.constant 0 : index
    %20 = vector.load %arg9[%c0_7, %c0_8] : memref<2x128xf32, #tpu.memory_space<vmem>>, vector<2x128xf32>
    %c0_9 = arith.constant 0 : index
    %c0_10 = arith.constant 0 : index
    %21 = vector.load %arg11[%c0_9, %c0_10] : memref<2x128xf32, #tpu.memory_space<vmem>>, vector<2x128xf32>
    %22 = arith.mulf %21, %12 : vector<2x128xf32>
    %23 = vector.shape_cast %22 : vector<2x128xf32> to vector<1x2x128xf32>
    %cst_11 = arith.constant dense<0.000000e+00> : vector<1xf32>
    %24 = vector.multi_reduction <add>, %23, %cst_11 [1, 2] : vector<1x2x128xf32> to vector<1xf32>
    %25 = vector.shape_cast %24 : vector<1xf32> to vector<1x1x1xf32>
    %26 = vector.extract %25[0, 0, 0] : f32 from vector<1x1x1xf32>
    %27 = arith.mulf %26, %18 : f32
    %c0_12 = arith.constant 0 : index
    %c0_13 = arith.constant 0 : index
    %28 = vector.load %arg12[%c0_12, %c0_13] : memref<2x128xf32, #tpu.memory_space<vmem>>, vector<2x128xf32>
    %29 = arith.mulf %28, %12 : vector<2x128xf32>
    %30 = vector.shape_cast %29 : vector<2x128xf32> to vector<1x2x128xf32>
    %cst_14 = arith.constant dense<0.000000e+00> : vector<1xf32>
    %31 = vector.multi_reduction <add>, %30, %cst_14 [1, 2] : vector<1x2x128xf32> to vector<1xf32>
    %32 = vector.shape_cast %31 : vector<1xf32> to vector<1x1x1xf32>
    %33 = vector.extract %32[0, 0, 0] : f32 from vector<1x1x1xf32>
    %34 = arith.mulf %33, %18 : f32
    %c0_15 = arith.constant 0 : index
    %c2 = arith.constant 2 : index
    %c0_16 = arith.constant 0 : index
    %c0_17 = arith.constant 0 : index
    %35 = vector.load %arg3[%c0_15, %c2, %c0_16, %c0_17] : memref<1x4x2x128xf32, #tpu.memory_space<vmem>>, vector<1x1x2x128xf32>
    %36 = vector.shape_cast %35 : vector<1x1x2x128xf32> to vector<2x128xf32>
    %37 = arith.mulf %36, %12 : vector<2x128xf32>
    %38 = vector.shape_cast %37 : vector<2x128xf32> to vector<1x2x128xf32>
    %cst_18 = arith.constant dense<0.000000e+00> : vector<1xf32>
    %39 = vector.multi_reduction <add>, %38, %cst_18 [1, 2] : vector<1x2x128xf32> to vector<1xf32>
    %40 = vector.shape_cast %39 : vector<1xf32> to vector<1x1x1xf32>
    %41 = vector.extract %40[0, 0, 0] : f32 from vector<1x1x1xf32>
    %42 = arith.mulf %41, %18 : f32
    %43 = vector.broadcast %42 : f32 to vector<2x128xf32>
    %44 = arith.subf %36, %43 : vector<2x128xf32>
    %45 = arith.mulf %44, %44 : vector<2x128xf32>
    %46 = arith.mulf %12, %45 : vector<2x128xf32>
    %47 = vector.shape_cast %46 : vector<2x128xf32> to vector<1x2x128xf32>
    %cst_19 = arith.constant dense<0.000000e+00> : vector<1xf32>
    %48 = vector.multi_reduction <add>, %47, %cst_19 [1, 2] : vector<1x2x128xf32> to vector<1xf32>
    %49 = vector.shape_cast %48 : vector<1xf32> to vector<1x1x1xf32>
    %50 = vector.extract %49[0, 0, 0] : f32 from vector<1x1x1xf32>
    %51 = arith.mulf %50, %18 : f32
    %cst_20 = arith.constant 1.000000e+01 : f32
    %52 = arith.mulf %42, %cst_20 : f32
    %53 = math.exp %52 : f32
    %54 = vector.broadcast %27 : f32 to vector<2x128xf32>
    %55 = arith.subf %19, %54 : vector<2x128xf32>
    %56 = arith.mulf %55, %55 : vector<2x128xf32>
    %57 = vector.broadcast %34 : f32 to vector<2x128xf32>
    %58 = arith.subf %20, %57 : vector<2x128xf32>
    %59 = arith.mulf %58, %58 : vector<2x128xf32>
    %60 = arith.addf %56, %59 : vector<2x128xf32>
    %cst_21 = arith.constant 0.000000e+00 : f32
    %61 = vector.broadcast %cst_21 : f32 to vector<2x128xf32>
    %62 = arith.subf %61, %60 : vector<2x128xf32>
    %63 = vector.broadcast %53 : f32 to vector<2x128xf32>
    %64 = arith.mulf %62, %63 : vector<2x128xf32>
    %65 = math.exp %64 : vector<2x128xf32>
    %c0_22 = arith.constant 0 : index
    %c0_23 = arith.constant 0 : index
    %66 = vector.load %arg10[%c0_22, %c0_23] : memref<2x128xf32, #tpu.memory_space<vmem>>, vector<2x128xf32>
    %67 = arith.subf %66, %65 : vector<2x128xf32>
    %68 = arith.mulf %67, %67 : vector<2x128xf32>
    %69 = arith.mulf %12, %68 : vector<2x128xf32>
    %70 = vector.shape_cast %69 : vector<2x128xf32> to vector<1x2x128xf32>
    %cst_24 = arith.constant dense<0.000000e+00> : vector<1xf32>
    %71 = vector.multi_reduction <add>, %70, %cst_24 [1, 2] : vector<1x2x128xf32> to vector<1xf32>
    %72 = vector.shape_cast %71 : vector<1xf32> to vector<1x1x1xf32>
    %73 = vector.extract %72[0, 0, 0] : f32 from vector<1x1x1xf32>
    %c0_25 = arith.constant 0 : index
    %c0_26 = arith.constant 0 : index
    %c0_27 = arith.constant 0 : index
    %c0_28 = arith.constant 0 : index
    %74 = vector.load %arg6[%c0_25, %c0_26, %c0_27, %c0_28] : memref<1x1x2x128xf32, #tpu.memory_space<vmem>>, vector<1x1x2x128xf32>
    %75 = vector.shape_cast %74 : vector<1x1x2x128xf32> to vector<2x128xf32>
    %76 = vector.shape_cast %65 : vector<2x128xf32> to vector<1x1x2x128xf32>
    tpu.vector_store %arg6[%c0_25, %c0_26, %c0_27, %c0_28], %76 {strides = array<i32>} : memref<1x1x2x128xf32, #tpu.memory_space<vmem>>, vector<1x1x2x128xf32>,
    %c0_i32_29 = arith.constant 0 : i32
    %77 = vector.broadcast %c0_i32_29 : i32 to vector<1x128xi32>
    %78 = arith.cmpi eq, %0, %77 : vector<1x128xi32>
    %cst_30 = arith.constant 0.000000e+00 : f32
    %79 = vector.broadcast %51 : f32 to vector<1x128xf32>
    %80 = vector.broadcast %cst_30 : f32 to vector<1x128xf32>
    %81 = arith.select %78, %79, %80 : vector<1x128xi1>, vector<1x128xf32>
    %c1_i32 = arith.constant 1 : i32
    %82 = vector.broadcast %c1_i32 : i32 to vector<1x128xi32>
    %83 = arith.cmpi eq, %0, %82 : vector<1x128xi32>
    %cst_31 = arith.constant 0.000000e+00 : f32
    %84 = vector.broadcast %73 : f32 to vector<1x128xf32>
    %85 = vector.broadcast %cst_31 : f32 to vector<1x128xf32>
    %86 = arith.select %83, %84, %85 : vector<1x128xi1>, vector<1x128xf32>
    %87 = arith.addf %81, %86 : vector<1x128xf32>
    %c2_i32 = arith.constant 2 : i32
    %88 = vector.broadcast %c2_i32 : i32 to vector<1x128xi32>
    %89 = arith.cmpi eq, %0, %88 : vector<1x128xi32>
    %cst_32 = arith.constant 0.000000e+00 : f32
    %90 = vector.broadcast %16 : f32 to vector<1x128xf32>
    %91 = vector.broadcast %cst_32 : f32 to vector<1x128xf32>
    %92 = arith.select %89, %90, %91 : vector<1x128xi1>, vector<1x128xf32>
    %93 = arith.addf %87, %92 : vector<1x128xf32>
    %c0_33 = arith.constant 0 : index
    %c0_34 = arith.constant 0 : index
    %94 = vector.load %arg13[%c0_33, %c0_34] : memref<1x128xf32, #tpu.memory_space<vmem>>, vector<1x128xf32>
    %95 = arith.addf %93, %94 : vector<1x128xf32>
    %c0_35 = arith.constant 0 : index
    %c0_36 = arith.constant 0 : index
    %c0_37 = arith.constant 0 : index
    %c0_38 = arith.constant 0 : index
    %96 = vector.load %arg7[%c0_35, %c0_36, %c0_37, %c0_38] : memref<1x1x1x128xf32, #tpu.memory_space<vmem>>, vector<1x1x1x128xf32>
    %97 = vector.shape_cast %96 : vector<1x1x1x128xf32> to vector<1x128xf32>
    %98 = vector.shape_cast %95 : vector<1x128xf32> to vector<1x1x1x128xf32>
    tpu.vector_store %arg7[%c0_35, %c0_36, %c0_37, %c0_38], %98 {strides = array<i32>} : memref<1x1x1x128xf32, #tpu.memory_space<vmem>>, vector<1x1x1x128xf32>,
    return
  }
  func.func @transform_0(%arg0: i32, %arg1: i32, %arg2: memref<2x3xi32, #tpu.memory_space<smem>>) -> (i32, i32, i32, i32) {
    %c0_i32 = arith.constant 0 : i32
    %c0_i32_0 = arith.constant 0 : i32
    %c0_i32_1 = arith.constant 0 : i32
    %c0_i32_2 = arith.constant 0 : i32
    return %arg0, %c0_i32, %c0_i32_0, %c0_i32_1 : i32, i32, i32, i32
  }
  func.func @transform_1(%arg0: i32, %arg1: i32, %arg2: memref<2x3xi32, #tpu.memory_space<smem>>) -> (i32, i32, i32) {
    %c0_i32 = arith.constant 0 : i32
    %c0_i32_0 = arith.constant 0 : i32
    %c0_i32_1 = arith.constant 0 : i32
    return %arg0, %c0_i32, %c0_i32_0 : i32, i32, i32
  }
  func.func @transform_2(%arg0: i32, %arg1: i32, %arg2: memref<2x3xi32, #tpu.memory_space<smem>>) -> (i32, i32, i32) {
    %c0_i32 = arith.constant 0 : i32
    %c0_i32_0 = arith.constant 0 : i32
    %c0_i32_1 = arith.constant 0 : i32
    return %arg0, %c0_i32, %c0_i32_0 : i32, i32, i32
  }
  func.func @transform_3(%arg0: i32, %arg1: i32, %arg2: memref<2x3xi32, #tpu.memory_space<smem>>) -> (i32, i32, i32, i32) {
    %c0_i32 = arith.constant 0 : i32
    %c0_i32_0 = arith.constant 0 : i32
    %c0_i32_1 = arith.constant 0 : i32
    return %arg0, %arg1, %c0_i32, %c0_i32_0 : i32, i32, i32, i32
  }
  func.func @transform_4(%arg0: i32, %arg1: i32, %arg2: memref<2x3xi32, #tpu.memory_space<smem>>) -> (i32, i32, i32, i32) {
    %c0_i32 = arith.constant 0 : i32
    %c0_i32_0 = arith.constant 0 : i32
    %c0_i32_1 = arith.constant 0 : i32
    return %arg0, %arg1, %c0_i32, %c0_i32_0 : i32, i32, i32, i32
  }
}

</mosaic_0001>

<llo_original>
// kernel: tpu_custom_call.1
$region0: #{tpu_custom_call.1}
  #allocation0 [shape = 'u32[]', space=smem, size = 0x4, offset = 0x4, fixed_abs, tag = 'smem constant byte address 0x4 - core index']
  #allocation1 [shape = 'u32[144,128]{1,0:T(1,128)}', space=vmem, size = 0x12000, scoped, tag = 'internal scratch']
  #allocation2 [shape = 'f32[2,128]{1,0:T(2,128)}', space=vmem, size = 0x400, scoped, tag = 'scratch operand']
  #allocation3 [shape = 'f32[2,128]{1,0:T(2,128)}', space=vmem, size = 0x400, scoped, tag = 'scratch operand']
  #allocation4 [shape = 'f32[2,128]{1,0:T(2,128)}', space=vmem, size = 0x400, scoped, tag = 'scratch operand']
  #allocation5 [shape = 'f32[2,128]{1,0:T(2,128)}', space=vmem, size = 0x400, scoped, tag = 'scratch operand']
  #allocation6 [shape = 'f32[2,128]{1,0:T(2,128)}', space=vmem, size = 0x400, scoped, tag = 'scratch operand']
  #allocation7 [shape = 'f32[1,128]{1,0:T(1,128)}', space=vmem, size = 0x200, scoped, tag = 'scratch operand']
  #allocation8 [shape = 's32[1]{0}', space=sflag, size = 0x4, scoped, tag = 'scoped memory for tpu_custom_call.1']
  #allocation9 [shape = 'u8[1024]{0}', space=smem, size = 0x400, scoped, tag = 'prefetched SMEM operand 0']
  %s0 = inlined_call_operand.hbm [shape: s32[2,3], index: 0, kind: input, shape index: {}]
  %s1 = inlined_call_operand.hbm [shape: f32[2,4,2,128], index: 1, kind: input, shape index: {}]
  %s2 = inlined_call_operand.hbm [shape: s32[2,2,128], index: 2, kind: input, shape index: {}]
  %s3 = inlined_call_operand.vmem [shape: s32[2,2,128], index: 3, kind: input, shape index: {}]
  %s4 = inlined_call_operand.hbm [shape: f32[2,3,2,128], index: 4, kind: output, shape index: {0}]
  %s5 = inlined_call_operand.hbm [shape: f32[2,3,1,128], index: 5, kind: output, shape index: {1}]
  %6 = xla_tuple %s4, %s5
  %s7 = sld [smem:[#allocation0]]
  $region65: #{tpu_custom_call.1} parent=0
    _
  %s9 = ssub.s32 1, %s7
  %s10 = scalar_select 0, %s9, %s7
  %12 = dma.hbm_to_smem %s0, 32, [#allocation9], [#allocation8]
  %13 = dma.done [#allocation8], 32
  %14 = sfence
  $region1: #{tpu_custom_call.1} parent=0
    #allocation10 [shape = 'u8[8192]{0}', space=vmem, size = 0x2000, scoped, tag = 'input window, operand 1']
    #allocation11 [shape = 's32[2]{0}', space=sflag, size = 0x8, scoped, tag = 'scoped memory for tpu_custom_call.1']
    #allocation12 [shape = 's32[2]{0}', space=sflag, size = 0x8, scoped, tag = 'scoped memory for tpu_custom_call.1']
    #allocation13 [shape = 'u8[2048]{0}', space=vmem, size = 0x800, scoped, tag = 'input window, operand 2']
    #allocation14 [shape = 's32[2]{0}', space=sflag, size = 0x8, scoped, tag = 'scoped memory for tpu_custom_call.1']
    #allocation15 [shape = 'u8[2048]{0}', space=vmem, size = 0x800, scoped, tag = 'output window, operand 0']
    #allocation16 [shape = 'u8[1024]{0}', space=vmem, size = 0x400, scoped, tag = 'output window, operand 1']
    #allocation17 [shape = 's32[2]{0}', space=sflag, size = 0x8, scoped, tag = 'scoped memory for tpu_custom_call.1']
    %15 = vsyncpa [#allocation11], 0
    %s16 = scalar_lea.sflag [#allocation11], 1
    %17 = vsyncpa %s16, 0
    %18 = vsyncpa [#allocation14], 0
    %s19 = scalar_lea.sflag [#allocation14], 1
    %20 = vsyncpa %s19, 0
    %21 = vsyncpa [#allocation12], 0
    %s22 = scalar_lea.sflag [#allocation12], 1
    %23 = vsyncpa %s22, 0
    %24 = vsyncpa [#allocation17], 0
    %s25 = scalar_lea.sflag [#allocation17], 1
    %26 = vsyncpa %s25, 0
    loop: start=0, step=1, limit=8
    $region2: #{tpu_custom_call.1} parent=1 // loop_pre_header
      _
    $region3: #{tpu_custom_call.1} parent=1 // loop_header
      %s28 = sphi 0, %s32
      %p29 = scmp.ge.s32.totalorder %s28, 8
      %s35 = sphi 0, %s47
      %s36 = sphi 0, %s43
      %s37 = sphi 0, %s35
      %s38 = sphi 0, %s36
      %s39 = sphi 0, %s37
      %s40 = sphi 0, %s38
      %s50 = sphi 0, %s52
      %s53 = sphi 0, %s50
      %s54 = sphi 0, %s53
      %s70 = sphi 0, %s54
      %s76 = sphi 0, %s78
      %s79 = sphi 0, %s76
      %s80 = sphi 0, %s79
      %s96 = sphi 0, %s80
      %s102 = sphi 0, %s104
      %s105 = sphi 0, %s102
      %s106 = sphi 0, %s105
      %s122 = sphi 0, %s106
      %s130 = sphi 0, %s132
      %s133 = sphi 0, %s130
      %s134 = sphi 0, %s133
      %s150 = sphi 0, %s134
      %s158 = sphi 0, %s160
      %s161 = sphi 0, %s158
      %s162 = sphi 0, %s161
      %s178 = sphi 0, %s162
    $region4: #{tpu_custom_call.1} parent=1 // loop_header_branch
      %31 = sbr.rel (%p29) target = $region8
    $region5: #{tpu_custom_call.1} parent=1 // loop_body
      %s33 = ssub.s32 %s28, 1
      %s34 = ssub.s32 %s28, 2
      %s41 = sadd.s32 1, %s36
      %p42 = scmp.ge.s32.totalorder %s41, 3
      %s43 = scalar_select %p42, 0, %s41
      %s44 = sadd.s32 1, %s35
      %s45 = scalar_select %p42, %s44, %s35
      %p46 = scmp.ge.s32.totalorder %s45, 2
      %s47 = scalar_select %p46, 0, %s45
      %s48 = ssub.s32 %s35, %s47
      %p49 = scmp.eq.s32.totalorder %s48, 0
      %s51 = sadd.s32 %s50, 1
      %s52 = scalar_select %p49, %s50, %s51
      %p55 = pneg %p49
      %p56 = scmp.eq.s32.totalorder %s28, 5
      %p57 = por %p55, %p56
      %p58 = scmp.ne.s32.totalorder %s50, %s53
      %p59 = scmp.eq.s32.totalorder %s28, 0
      %p60 = por %p58, %p59
      %p61 = scmp.ne.s32.totalorder %s50, %s53
      %p62 = scmp.eq.s32.totalorder %s33, 5
      %p63 = por %p61, %p62
      %p64 = scmp.ne.s32.totalorder %s53, %s54
      %p65 = scmp.eq.s32.totalorder %s33, 0
      %p66 = por %p64, %p65
      %p67 = scmp.ne.s32.totalorder %s53, %s54
      %p68 = scmp.eq.s32.totalorder %s34, 5
      %p69 = por %p67, %p68
      %p71 = scmp.ne.s32.totalorder %s54, %s70
      %p72 = scmp.eq.s32.totalorder %s34, 0
      %p73 = por %p71, %p72
      %s74 = ssub.s32 %s35, %s47
      %p75 = scmp.eq.s32.totalorder %s74, 0
      %s77 = sadd.s32 %s76, 1
      %s78 = scalar_select %p75, %s76, %s77
      %p81 = pneg %p75
      %p82 = scmp.eq.s32.totalorder %s28, 5
      %p83 = por %p81, %p82
      %p84 = scmp.ne.s32.totalorder %s76, %s79
      %p85 = scmp.eq.s32.totalorder %s28, 0
      %p86 = por %p84, %p85
      %p87 = scmp.ne.s32.totalorder %s76, %s79
      %p88 = scmp.eq.s32.totalorder %s33, 5
      %p89 = por %p87, %p88
      %p90 = scmp.ne.s32.totalorder %s79, %s80
      %p91 = scmp.eq.s32.totalorder %s33, 0
      %p92 = por %p90, %p91
      %p93 = scmp.ne.s32.totalorder %s79, %s80
      %p94 = scmp.eq.s32.totalorder %s34, 5
      %p95 = por %p93, %p94
      %p97 = scmp.ne.s32.totalorder %s80, %s96
      %p98 = scmp.eq.s32.totalorder %s34, 0
      %p99 = por %p97, %p98
      %s100 = ssub.s32 %s35, %s47
      %p101 = scmp.eq.s32.totalorder %s100, 0
      %s103 = sadd.s32 %s102, 1
      %s104 = scalar_select %p101, %s102, %s103
      %p107 = pneg %p101
      %p108 = scmp.eq.s32.totalorder %s28, 5
      %p109 = por %p107, %p108
      %p110 = scmp.ne.s32.totalorder %s102, %s105
      %p111 = scmp.eq.s32.totalorder %s28, 0
      %p112 = por %p110, %p111
      %p113 = scmp.ne.s32.totalorder %s102, %s105
      %p114 = scmp.eq.s32.totalorder %s33, 5
      %p115 = por %p113, %p114
      %p116 = scmp.ne.s32.totalorder %s105, %s106
      %p117 = scmp.eq.s32.totalorder %s33, 0
      %p118 = por %p116, %p117
      %p119 = scmp.ne.s32.totalorder %s105, %s106
      %p120 = scmp.eq.s32.totalorder %s34, 5
      %p121 = por %p119, %p120
      %p123 = scmp.ne.s32.totalorder %s106, %s122
      %p124 = scmp.eq.s32.totalorder %s34, 0
      %p125 = por %p123, %p124
      %s126 = ssub.s32 %s35, %s47
      %s127 = ssub.s32 %s36, %s43
      %s128 = sor.u32 %s126, %s127
      %p129 = scmp.eq.s32.totalorder %s128, 0
      %s131 = sadd.s32 %s130, 1
      %s132 = scalar_select %p129, %s130, %s131
      %p135 = pneg %p129
      %p136 = scmp.eq.s32.totalorder %s28, 5
      %p137 = por %p135, %p136
      %p138 = scmp.ne.s32.totalorder %s130, %s133
      %p139 = scmp.eq.s32.totalorder %s28, 0
      %p140 = por %p138, %p139
      %p141 = scmp.ne.s32.totalorder %s130, %s133
      %p142 = scmp.eq.s32.totalorder %s33, 5
      %p143 = por %p141, %p142
      %p144 = scmp.ne.s32.totalorder %s133, %s134
      %p145 = scmp.eq.s32.totalorder %s33, 0
      %p146 = por %p144, %p145
      %p147 = scmp.ne.s32.totalorder %s133, %s134
      %p148 = scmp.eq.s32.totalorder %s34, 5
      %p149 = por %p147, %p148
      %p151 = scmp.ne.s32.totalorder %s134, %s150
      %p152 = scmp.eq.s32.totalorder %s34, 0
      %p153 = por %p151, %p152
      %s154 = ssub.s32 %s35, %s47
      %s155 = ssub.s32 %s36, %s43
      %s156 = sor.u32 %s154, %s155
      %p157 = scmp.eq.s32.totalorder %s156, 0
      %s159 = sadd.s32 %s158, 1
      %s160 = scalar_select %p157, %s158, %s159
      %p163 = pneg %p157
      %p164 = scmp.eq.s32.totalorder %s28, 5
      %p165 = por %p163, %p164
      %p166 = scmp.ne.s32.totalorder %s158, %s161
      %p167 = scmp.eq.s32.totalorder %s28, 0
      %p168 = por %p166, %p167
      %p169 = scmp.ne.s32.totalorder %s158, %s161
      %p170 = scmp.eq.s32.totalorder %s33, 5
      %p171 = por %p169, %p170
      %p172 = scmp.ne.s32.totalorder %s161, %s162
      %p173 = scmp.eq.s32.totalorder %s33, 0
      %p174 = por %p172, %p173
      %p175 = scmp.ne.s32.totalorder %s161, %s162
      %p176 = scmp.eq.s32.totalorder %s34, 5
      %p177 = por %p175, %p176
      %p179 = scmp.ne.s32.totalorder %s162, %s178
      %p180 = scmp.eq.s32.totalorder %s34, 0
      %p181 = por %p179, %p180
      %p182 = scmp.le.s32.totalorder 1, %s28
      %p183 = scmp.lt.s32.totalorder %s28, 7
      %p184 = pnand %p182, %p183
      %p185 = pneg %p184
      // Predicated region
      $region9: #{tpu_custom_call.1} parent=5 // pred_check
        _
      $region10: #{tpu_custom_call.1} parent=5 // pred_check_branch
        %187 = sbr.rel (%p184) target = $region12
      $region11: #{tpu_custom_call.1} parent=5 // pred_region
        %s188 = ssub.s32 %s28, 1
      $region12: #{tpu_custom_call.1} parent=5 // pred_fallthru
        _
      %p189 = scmp.lt.s32.totalorder %s28, 6
      // Predicated region
      $region13: #{tpu_custom_call.1} parent=5 // pred_check
        %p190 = pneg %p189
      $region14: #{tpu_custom_call.1} parent=5 // pred_check_branch
        %192 = sbr.rel (%p190) target = $region16
      $region15: #{tpu_custom_call.1} parent=5 // pred_region
        // Predicated region
        $region17: #{tpu_custom_call.1} parent=15 // pred_check
          %p193 = pneg %p60
        $region18: #{tpu_custom_call.1} parent=15 // pred_check_branch
          %195 = sbr.rel (%p193) target = $region20
        $region19: #{tpu_custom_call.1} parent=15 // pred_region
          %s196 = sand.u32 %s50, 1
          %s197 = scalar_lea.sflag [#allocation11], %s196
          %s198 = sand.u32 %s50, 1
          %s199 = smul.addr %s198, 8
          %s200 = scalar_lea.vmem [#allocation10], %s199
          %s202 = ssub.s32 128, 128
          %203 = vsyncadd %s197, %s202
          %s204 = smul.addr %s35, 4
          %s205 = smul.addr %s204, 32
          %s206 = scalar_lea.hbm %s1, %s205
          %s207 = sshll.u32 %s200, 4
          %s208 = int_to_ptr.vmem [resolvable:$true] %s207
          %213 = dma.hbm_to_vmem [thread:$0]  %s206, 128, %s208, %s197, 32, 32, 2
        $region20: #{tpu_custom_call.1} parent=15 // pred_fallthru
          _
        // Predicated region
        $region21: #{tpu_custom_call.1} parent=15 // pred_check
          %p214 = pneg %p86
        $region22: #{tpu_custom_call.1} parent=15 // pred_check_branch
          %216 = sbr.rel (%p214) target = $region24
        $region23: #{tpu_custom_call.1} parent=15 // pred_region
          %s217 = sand.u32 %s76, 1
          %s218 = scalar_lea.sflag [#allocation14], %s217
          %s219 = sand.u32 %s76, 1
          %s220 = smul.addr %s219, 2
          %s221 = scalar_lea.vmem [#allocation13], %s220
          %s223 = ssub.s32 32, 32
          %224 = vsyncadd %s218, %s223
          %s225 = smul.addr %s35, 32
          %s226 = scalar_lea.hbm %s2, %s225
          %s228 = sshll.u32 %s221, 4
          %s229 = int_to_ptr.vmem [resolvable:$true] %s228
          %231 = dma.hbm_to_vmem [thread:$0]  %s226, 32, %s229, %s218
        $region24: #{tpu_custom_call.1} parent=15 // pred_fallthru
          _
        // Predicated region
        $region25: #{tpu_custom_call.1} parent=15 // pred_check
          %p232 = pneg %p112
        $region26: #{tpu_custom_call.1} parent=15 // pred_check_branch
          %234 = sbr.rel (%p232) target = $region28
        $region27: #{tpu_custom_call.1} parent=15 // pred_region
          %p235 = scmp.lt.s32.totalorder %s35, 1
          %s236 = scalar_select %p235, %s35, 1
          %s237 = smul.addr %s236, 2
          %s238 = scalar_lea.vmem %s3, %s237
        $region28: #{tpu_custom_call.1} parent=15 // pred_fallthru
          _
      $region16: #{tpu_custom_call.1} parent=5 // pred_fallthru
        _
      %p239 = scmp.le.s32.totalorder 1, %s28
      %p240 = scmp.lt.s32.totalorder %s28, 7
      %p241 = pnand %p239, %p240
      %p242 = pneg %p241
      // Predicated region
      $region29: #{tpu_custom_call.1} parent=5 // pred_check
        _
      $region30: #{tpu_custom_call.1} parent=5 // pred_check_branch
        %244 = sbr.rel (%p241) target = $region32
      $region31: #{tpu_custom_call.1} parent=5 // pred_region
        %s245 = ssub.s32 %s28, 1
        %s246 = sand.u32 %s53, 1
        %s247 = scalar_lea.sflag [#allocation11], %s246
        %s248 = sand.u32 %s53, 1
        %s249 = smul.addr %s248, 8
        %s250 = scalar_lea.vmem [#allocation10], %s249
        // Predicated region
        $region33: #{tpu_custom_call.1} parent=31 // pred_check
          %p251 = pneg %p66
        $region34: #{tpu_custom_call.1} parent=31 // pred_check_branch
          %253 = sbr.rel (%p251) target = $region36
        $region35: #{tpu_custom_call.1} parent=31 // pred_region
          %254 = dma.done %s247, 128
        $region36: #{tpu_custom_call.1} parent=31 // pred_fallthru
          _
        %s255 = sand.u32 %s79, 1
        %s256 = scalar_lea.sflag [#allocation14], %s255
        %s257 = sand.u32 %s79, 1
        %s258 = smul.addr %s257, 2
        %s259 = scalar_lea.vmem [#allocation13], %s258
        // Predicated region
        $region37: #{tpu_custom_call.1} parent=31 // pred_check
          %p260 = pneg %p92
        $region38: #{tpu_custom_call.1} parent=31 // pred_check_branch
          %262 = sbr.rel (%p260) target = $region40
        $region39: #{tpu_custom_call.1} parent=31 // pred_region
          %263 = dma.done %s256, 32
        $region40: #{tpu_custom_call.1} parent=31 // pred_fallthru
          _
        %s264 = sand.u32 %s53, 1
        %s265 = scalar_lea.sflag [#allocation11], %s264
        %s266 = sand.u32 %s53, 1
        %s267 = smul.addr %s266, 8
        %s268 = scalar_lea.vmem [#allocation10], %s267
        %p269 = pneg %p66
        %p270 = pneg %p63
        %s271 = sand.u32 %s79, 1
        %s272 = scalar_lea.sflag [#allocation14], %s271
        %s273 = sand.u32 %s79, 1
        %s274 = smul.addr %s273, 2
        %s275 = scalar_lea.vmem [#allocation13], %s274
        %p276 = pneg %p92
        %p277 = pneg %p89
        %p278 = scmp.lt.s32.totalorder %s37, 1
        %s279 = scalar_select %p278, %s37, 1
        %s280 = smul.addr %s279, 2
        %s281 = scalar_lea.vmem %s3, %s280
        %p282 = pneg %p118
        %p283 = pneg %p115
        %p284 = pneg %p146
        %p285 = pneg %p143
        %s286 = sand.u32 %s133, 1
        %s287 = scalar_lea.sflag [#allocation12], %s286
        %s288 = sand.u32 %s133, 1
        %s289 = smul.addr %s288, 2
        %s290 = scalar_lea.vmem [#allocation15], %s289
        %p291 = pneg %p174
        %p292 = pneg %p171
        %s293 = sand.u32 %s161, 1
        %s294 = scalar_lea.sflag [#allocation17], %s293
        %s295 = sand.u32 %s161, 1
        %s296 = scalar_lea.vmem [#allocation16], %s295
        %p297 = scmp.lt.s32.totalorder %s37, 1
        %s298 = scalar_select %p297, %s37, 1
        %s299 = smul.addr %s298, 2
        %s300 = scalar_lea.vmem %s3, %s299
        %v301 = vlaneseq
        %v302 = vand.u32 %v301, 127
        %p303 = scmp.eq.s32.totalorder %s38, 0
        // Predicated region
        $region41: #{tpu_custom_call.1} parent=31 // pred_check
          %p304 = pneg %p303
        $region42: #{tpu_custom_call.1} parent=31 // pred_check_branch
          %306 = sbr.rel (%p304) target = $region44
        $region43: #{tpu_custom_call.1} parent=31 // pred_region
          %v307 = vlaneseq
          %v308 = vshrl.u32 %v307, 7
          %v309 = vcvt.s32.f32 %v308
          %v310 = vcvt.s32.f32 %v302
          %v311 = vmul.f32 %v309, 128.0
          %v312 = vadd.f32 %v311, %v310
          %v313 = vadd.f32 %v312, 0.5
          %v314 = vmul.f32 %v313, 0.0625
          %v315 = vfloor.f32 %v314
          %v316 = vmul.f32 %v315, 16.0
          %v317 = vsub.f32 %v312, %v316
          %v318 = vmul.f32 %v317, 0.0009770396
          %319 = vst [vmem:[#allocation5] sm:$0x3] %v318
          %v320 = vmul.f32 %v315, 0.0009775171
          %321 = vst [vmem:[#allocation6] sm:$0x3] %v320
          %v322 = vld [vmem:[%s250] sm:$0x3]
          %v323 = vtanh.pop %v322
          %v324 = vld [vmem:[#allocation5] sm:$0x3]
          %v325 = vadd.f32 %v323, %v324
          %326 = vst [vmem:[#allocation2] sm:$0x3] %v325
          %s327 = scalar_lea.vmem %s250, 2 [#allocation10]
          %v328 = vld [vmem:[%s327] sm:$0x3]
          %v329 = vtanh.pop %v328
          %v330 = vld [vmem:[#allocation6] sm:$0x3]
          %v331 = vadd.f32 %v329, %v330
          %332 = vst [vmem:[#allocation3] sm:$0x3] %v331
          %s333 = scalar_lea.vmem %s250, 6 [#allocation10]
          %v334 = vld [vmem:[%s333] sm:$0x3]
          %v335 = vxor.u32 %v334, 2147483648
          %v336 = vmul.f32 %v335, 1.442695
          %v337 = vpow.pop %v336
          %v338 = vadd.f32 %v337, 1.0
          %v339 = vrcp.pop %v338
          %v340 = vmul.f32 1.0, %v339
          %341 = vst [vmem:[#allocation4] sm:$0x3] %v340
          %v342 = vld [vmem:[%s300] sm:$0x3]
          %vm343 = vcmp.eq.s32.totalorder %v342, 0
          %v344 = vsel %vm343, 1, 0
          %v345 = vcvt.s32.f32 %v344
          %vm346 = vcmp.eq.s32.totalorder %v302, 3
          %v347 = vmul.f32 %v345, %v340
          %v348 = vmul.f32 %v347, %v340
          %vm349 = vcmask 1041408
          %v350 = vsel %vm349, %v348, 0.0
          %351 = vadd.xlane.f32.xlu0 %v350
          %v352 = vpop.xlane.xlu0 %351
          %v353 = vrot.slane %v352, 4
          %v354 = vadd.f32 %v352, %v353
          %v355 = vrot.slane %v354, 2
          %v356 = vadd.f32 %v354, %v355
          %v357 = vrot.slane %v356, 1
          %v358 = vadd.f32 %v356, %v357
          %s359 = vtos %v358
          %v360 = vstv %s359
          %v361 = vsel %vm346, %v360, 0.0
          %362 = vst [vmem:[#allocation7] sm:$0x1] %v361
        $region44: #{tpu_custom_call.1} parent=31 // pred_fallthru
          _
        %s363 = sshra.s32 %s38, 7
        %s364 = sand.u32 %s38, 127
        %s365 = sadd.s32 %s363, %s37
        %s366 = smul.u32 %s365, 128
        %s367 = sshra.s32 %s38, 7
        %s368 = sand.u32 %s38, 127
        %s369 = sadd.s32 %s366, %s368
        %s370 = sld [smem:[#allocation9 + %s369]]
        %v371 = vld [vmem:[%s259] sm:$0x3]
        %v372 = vstv %s370
        %vm373 = vcmp.eq.s32.totalorder %v371, %v372
        %v374 = vsel %vm373, 1, 0
        %v375 = vcvt.s32.f32 %v374
        %vm376 = vcmask 1041408
        %v377 = vsel %vm376, %v375, 0.0
        %378 = vadd.xlane.f32.xlu0 %v377
        %v379 = vpop.xlane.xlu0 %378
        %v380 = vrot.slane %v379, 4
        %v381 = vadd.f32 %v379, %v380
        %v382 = vrot.slane %v381, 2
        %v383 = vadd.f32 %v381, %v382
        %v384 = vrot.slane %v383, 1
        %v385 = vadd.f32 %v383, %v384
        %s386 = vtos %v385
        %s387 = smax.f32 %s386, 1.0
        %v388 = vstv %s387
        %v389 = vrcp.pop %v388
        %s390 = vtos %v389
        %v391 = vld [vmem:[#allocation2] sm:$0x3]
        %v392 = vld [vmem:[#allocation3] sm:$0x3]
        %v393 = vld [vmem:[#allocation5] sm:$0x3]
        %v394 = vmul.f32 %v393, %v375
        %v395 = vsel %vm376, %v394, 0.0
        %396 = vadd.xlane.f32.xlu0 %v395
        %v397 = vpop.xlane.xlu0 %396
        %v398 = vrot.slane %v397, 4
        %v399 = vadd.f32 %v397, %v398
        %v400 = vrot.slane %v399, 2
        %v401 = vadd.f32 %v399, %v400
        %v402 = vrot.slane %v401, 1
        %v403 = vadd.f32 %v401, %v402
        %s404 = vtos %v403
        %s405 = smul.f32 %s404, %s390
        %v406 = vld [vmem:[#allocation6] sm:$0x3]
        %v407 = vmul.f32 %v406, %v375
        %v408 = vsel %vm376, %v407, 0.0
        %409 = vadd.xlane.f32.xlu0 %v408
        %v410 = vpop.xlane.xlu0 %409
        %v411 = vrot.slane %v410, 4
        %v412 = vadd.f32 %v410, %v411
        %v413 = vrot.slane %v412, 2
        %v414 = vadd.f32 %v412, %v413
        %v415 = vrot.slane %v414, 1
        %v416 = vadd.f32 %v414, %v415
        %s417 = vtos %v416
        %s418 = smul.f32 %s417, %s390
        %s419 = scalar_lea.vmem %s250, 4 [#allocation10]
        %v420 = vld [vmem:[%s419] sm:$0x3]
        %v421 = vmul.f32 %v420, %v375
        %v422 = vsel %vm376, %v421, 0.0
        %423 = vadd.xlane.f32.xlu0 %v422
        %v424 = vpop.xlane.xlu0 %423
        %v425 = vrot.slane %v424, 4
        %v426 = vadd.f32 %v424, %v425
        %v427 = vrot.slane %v426, 2
        %v428 = vadd.f32 %v426, %v427
        %v429 = vrot.slane %v428, 1
        %v430 = vadd.f32 %v428, %v429
        %s431 = vtos %v430
        %s432 = smul.f32 %s431, %s390
        %v433 = vstv %s432
        %v434 = vsub.f32 %v420, %v433
        %v435 = vmul.f32 %v434, %v434
        %v436 = vmul.f32 %v375, %v435
        %v437 = vsel %vm376, %v436, 0.0
        %438 = vadd.xlane.f32.xlu0 %v437
        %v439 = vpop.xlane.xlu0 %438
        %v440 = vrot.slane %v439, 4
        %v441 = vadd.f32 %v439, %v440
        %v442 = vrot.slane %v441, 2
        %v443 = vadd.f32 %v441, %v442
        %v444 = vrot.slane %v443, 1
        %v445 = vadd.f32 %v443, %v444
        %s446 = vtos %v445
        %s447 = smul.f32 %s446, %s390
        %s448 = smul.f32 %s432, 10.0
        %v449 = vstv %s448
        %v450 = vmul.f32 %v449, 1.442695
        %v451 = vpow.pop %v450
        %s452 = vtos %v451
        %v453 = vstv %s405
        %v454 = vsub.f32 %v391, %v453
        %v455 = vmul.f32 %v454, %v454
        %v456 = vstv %s418
        %v457 = vsub.f32 %v392, %v456
        %v458 = vmul.f32 %v457, %v457
        %v459 = vadd.f32 %v455, %v458
        %v460 = vsub.f32 0.0, %v459
        %v461 = vstv %s452
        %v462 = vmul.f32 %v460, %v461
        %v463 = vmul.f32 %v462, 1.442695
        %v464 = vpow.pop %v463
        %v465 = vld [vmem:[#allocation4] sm:$0x3]
        %v466 = vsub.f32 %v465, %v464
        %v467 = vmul.f32 %v466, %v466
        %v468 = vmul.f32 %v375, %v467
        %v469 = vsel %vm376, %v468, 0.0
        %470 = vadd.xlane.f32.xlu0 %v469
        %v471 = vpop.xlane.xlu0 %470
        %v472 = vrot.slane %v471, 4
        %v473 = vadd.f32 %v471, %v472
        %v474 = vrot.slane %v473, 2
        %v475 = vadd.f32 %v473, %v474
        %v476 = vrot.slane %v475, 1
        %v477 = vadd.f32 %v475, %v476
        %s478 = vtos %v477
        %479 = vst [vmem:[%s290] sm:$0x3] %v464
        %vm480 = vcmp.eq.s32.totalorder %v302, 0
        %v481 = vstv %s447
        %v482 = vsel %vm480, %v481, 0.0
        %vm483 = vcmp.eq.s32.totalorder %v302, 1
        %v484 = vstv %s478
        %v485 = vsel %vm483, %v484, 0.0
        %v486 = vadd.f32 %v482, %v485
        %vm487 = vcmp.eq.s32.totalorder %v302, 2
        %v488 = vstv %s386
        %v489 = vsel %vm487, %v488, 0.0
        %v490 = vadd.f32 %v486, %v489
        %v491 = vld [vmem:[#allocation7] sm:$0x1]
        %v492 = vadd.f32 %v490, %v491
        %493 = vst [vmem:[%s296] sm:$0x1] %v492
        %s494 = sand.u32 %s133, 1
        %s495 = scalar_lea.sflag [#allocation12], %s494
        %s496 = sand.u32 %s133, 1
        %s497 = smul.addr %s496, 2
        %s498 = scalar_lea.vmem [#allocation15], %s497
        %s499 = sand.u32 %s161, 1
        %s500 = scalar_lea.sflag [#allocation17], %s499
        %s501 = sand.u32 %s161, 1
        %s502 = scalar_lea.vmem [#allocation16], %s501
        // Predicated region
        $region45: #{tpu_custom_call.1} parent=31 // pred_check
          %p503 = pneg %p143
        $region46: #{tpu_custom_call.1} parent=31 // pred_check_branch
          %505 = sbr.rel (%p503) target = $region48
        $region47: #{tpu_custom_call.1} parent=31 // pred_region
          %s507 = ssub.s32 32, 32
          %508 = vsyncadd %s495, %s507
          %s509 = smul.addr %s37, 3
          %s510 = sadd.s32 %s38, %s509
          %s511 = smul.addr %s510, 32
          %s512 = scalar_lea.hbm %s4, %s511
          %s514 = sshll.u32 %s498, 4
          %s515 = int_to_ptr.vmem [resolvable:$true] %s514
          %517 = dma.vmem_to_hbm [thread:$0]  %s515, 32, %s512, %s495
        $region48: #{tpu_custom_call.1} parent=31 // pred_fallthru
          _
        // Predicated region
        $region49: #{tpu_custom_call.1} parent=31 // pred_check
          %p518 = pneg %p171
        $region50: #{tpu_custom_call.1} parent=31 // pred_check_branch
          %520 = sbr.rel (%p518) target = $region52
        $region51: #{tpu_custom_call.1} parent=31 // pred_region
          %s522 = ssub.s32 16, 16
          %523 = vsyncadd %s500, %s522
          %s524 = smul.addr %s37, 3
          %s525 = sadd.s32 %s38, %s524
          %s526 = smul.addr %s525, 16
          %s527 = scalar_lea.hbm %s5, %s526
          %s529 = sshll.u32 %s502, 4
          %s530 = int_to_ptr.vmem [resolvable:$true] %s529
          %532 = dma.vmem_to_hbm [thread:$0]  %s530, 16, %s527, %s500
        $region52: #{tpu_custom_call.1} parent=31 // pred_fallthru
          _
      $region32: #{tpu_custom_call.1} parent=5 // pred_fallthru
        _
      %p533 = scmp.le.s32.totalorder 2, %s28
      // Predicated region
      $region53: #{tpu_custom_call.1} parent=5 // pred_check
        %p534 = pneg %p533
      $region54: #{tpu_custom_call.1} parent=5 // pred_check_branch
        %536 = sbr.rel (%p534) target = $region56
      $region55: #{tpu_custom_call.1} parent=5 // pred_region
        %s537 = ssub.s32 %s28, 2
        // Predicated region
        $region57: #{tpu_custom_call.1} parent=55 // pred_check
          %p538 = pneg %p149
        $region58: #{tpu_custom_call.1} parent=55 // pred_check_branch
          %540 = sbr.rel (%p538) target = $region60
        $region59: #{tpu_custom_call.1} parent=55 // pred_region
          %s541 = sand.u32 %s134, 1
          %s542 = scalar_lea.sflag [#allocation12], %s541
          %s543 = sand.u32 %s134, 1
          %s544 = smul.addr %s543, 2
          %s545 = scalar_lea.vmem [#allocation15], %s544
          %546 = dma.done %s542, 32
        $region60: #{tpu_custom_call.1} parent=55 // pred_fallthru
          _
        // Predicated region
        $region61: #{tpu_custom_call.1} parent=55 // pred_check
          %p547 = pneg %p177
        $region62: #{tpu_custom_call.1} parent=55 // pred_check_branch
          %549 = sbr.rel (%p547) target = $region64
        $region63: #{tpu_custom_call.1} parent=55 // pred_region
          %s550 = sand.u32 %s162, 1
          %s551 = scalar_lea.sflag [#allocation17], %s550
          %s552 = sand.u32 %s162, 1
          %s553 = scalar_lea.vmem [#allocation16], %s552
          %554 = dma.done %s551, 16
        $region64: #{tpu_custom_call.1} parent=55 // pred_fallthru
          _
      $region56: #{tpu_custom_call.1} parent=5 // pred_fallthru
        _
    $region6: #{tpu_custom_call.1} parent=1 // loop_footer
      %s32 = sadd.s32 1, %s28
    $region7: #{tpu_custom_call.1} parent=1 // loop_footer_branch
      %27 = sbr.rel target = $region3
    $region8: #{tpu_custom_call.1} parent=1 // loop_exit
      _
    %555 = vsyncpa [#allocation11], 1
    %s556 = scalar_lea.sflag [#allocation11], 1
    %557 = vsyncpa %s556, 1
    %558 = vsyncpa [#allocation14], 1
    %s559 = scalar_lea.sflag [#allocation14], 1
    %560 = vsyncpa %s559, 1
    %561 = vsyncpa [#allocation12], 1
    %s562 = scalar_lea.sflag [#allocation12], 1
    %563 = vsyncpa %s562, 1
    %564 = vsyncpa [#allocation17], 1
    %s565 = scalar_lea.sflag [#allocation17], 1
    %566 = vsyncpa %s565, 1

</llo_original>
